<compile_context>
chip_gen: v7x
topology: tpu7x:2x2x1
jax: 0.10.0
libtpu: 0.0.40
codegen_flags: <defaults>
</compile_context>

<pallas_src>
import functools
import math

import numpy as np
import jax
import jax.numpy as jnp
from jax.experimental import pallas as pl
from jax.experimental.pallas import tpu as pltpu


def make_sinusoid_table(n_position: int, d_hid: int) -> jnp.ndarray:
    """Identical (float64-built) to PositionalEncoding._get_sinusoid_encoding_table."""
    pos = np.arange(n_position, dtype=np.float64)[:, None]            # (P, 1)
    hid = np.arange(d_hid, dtype=np.int64)[None, :]                    # (1, D)
    angle = pos / np.power(10000.0, 2.0 * (hid // 2) / float(d_hid))   # (P, D)
    table = np.empty_like(angle)
    table[:, 0::2] = np.sin(angle[:, 0::2])
    table[:, 1::2] = np.cos(angle[:, 1::2])
    return jnp.asarray(table, dtype=jnp.float32)


def _pe_concat_kernel(x_ref, pe_ref, o_ref, *, d: int, aligned: bool):
    # x_ref: (T, D) rows of the input; pe_ref: (T, D) matching sinusoid rows (resident
    # or streamed); o_ref: (T, 2D) = [ x | pe ].
    if aligned:
        # D % 128 == 0: two lane-aligned, unmasked full-lane stores; no concat temp.
        o_ref[:, :d] = x_ref[...]
        o_ref[:, d:] = pe_ref[...]
    else:
        # Lane-unaligned D: build the tile once and issue a single full-width store
        # (output block last dim equals the full array width, so this is legal).
        o_ref[...] = jnp.concatenate([x_ref[...], pe_ref[...]], axis=-1)


def _tpu_vmem_capacity_bytes() -> int:
    try:
        return int(pltpu.get_tpu_info().vmem_capacity_bytes)
    except Exception:
        return 64 * 1024 * 1024   # conservative default: v7x per-TensorCore VMEM


def positional_encoding_forward(
    x: jnp.ndarray, *, d_hid: int, n_position: int, seq_tiled: bool | None = None
) -> jnp.ndarray:
    """x: (B, S, D). Returns (B, S, 2*D) = cat(x, sinusoid_table(n_position, d_hid)[:S, :D])."""
    B, S, D = x.shape
    assert n_position >= S, f"n_position ({n_position}) must be >= sequence length ({S})"
    assert d_hid >= D, f"d_hid ({d_hid}) must be >= hidden size of x ({D})"

    itemsize = jnp.dtype(x.dtype).itemsize
    pack = {4: 8, 2: 16, 1: 32}.get(itemsize, 8)          # sublane packing per dtype
    unit = S * pack // math.gcd(S, pack)                  # lcm(S, pack): row-tile quantum
    R = B * S

    # Exact (float64-built) table, sliced like pos_table[:, :S, :D] in the module.
    table = make_sinusoid_table(n_position, d_hid)[:S, :D].astype(x.dtype)   # (S, D)

    # Generation-aware sizing.
    vmem_phys = _tpu_vmem_capacity_bytes()
    tile_budget = min(40 * 1024 * 1024, max(8 * 1024 * 1024, vmem_phys // 3))
    vmem_limit = min(96 * 1024 * 1024, max(32 * 1024 * 1024, (vmem_phys * 3) // 4))

    # Per-row VMEM cost per step ~= 2x input tile + 2x output tile + resident table
    # = (2 + 4 + 2) * D * itemsize bytes.
    rows_by_vmem = max(pack, tile_budget // (8 * D * itemsize))
    # Target ~4 MiB of output per grid step to amortize the ~0.35 us/step overhead.
    rows_by_bytes = max(pack, (4 * 1024 * 1024) // (2 * D * itemsize))

    if seq_tiled is None:
        seq_tiled = rows_by_vmem < unit   # a whole-S-multiple tile would not fit the budget

    aligned = (D % 128 == 0)
    kernel = functools.partial(_pe_concat_kernel, d=D, aligned=aligned)
    cparams = dict(vmem_limit_bytes=vmem_limit)

    if not seq_tiled:
        # ---- Path A (common): row-folded, resident replicated table ---------------
        x_rows = x.reshape(R, D)
        if R <= unit:
            tR = R                                            # full extent (always % S)
        else:
            tR = max(unit, (min(rows_by_bytes, rows_by_vmem) // unit) * unit)
            tR = min(tR, (R // unit) * unit)
            # v7x megacore: make sure the parallel axis has >= 2 steps when we can split.
            if pl.cdiv(R, tR) < 2 and R >= 2 * unit:
                tR = max(unit, pl.cdiv(R, 2 * unit) * unit)

        # Host-side replication of the tiny table to exactly tR rows (tR % S == 0), so the
        # kernel needs no tiling/reshape/mod at all; DMA'd once (constant index_map).
        pe_rows = jnp.tile(table, (tR // S, 1))               # (tR, D)

        out_rows = pl.pallas_call(
            kernel,
            out_shape=jax.ShapeDtypeStruct((R, 2 * D), x.dtype),
            grid_spec=pltpu.PrefetchScalarGridSpec(
                num_scalar_prefetch=0,
                grid=(pl.cdiv(R, tR),),
                in_specs=[
                    pl.BlockSpec((tR, D), lambda i: (i, 0)),      # streamed x rows
                    pl.BlockSpec((tR, D), lambda i: (0, 0)),      # resident pe rows
                ],
                out_specs=pl.BlockSpec((tR, 2 * D), lambda i: (i, 0)),
            ),
            compiler_params=pltpu.CompilerParams(
                dimension_semantics=("parallel",), **cparams
            ),
        )(x_rows, pe_rows)
        return out_rows.reshape(B, S, 2 * D)

    # ---- Path B (very large S): tile the sequence, stream the matching table slice ----
    tS = max(pack, (min(rows_by_bytes, rows_by_vmem) // pack) * pack)
    if tS >= S:
        tS = S
    out = pl.pallas_call(
        kernel,
        out_shape=jax.ShapeDtypeStruct((B, S, 2 * D), x.dtype),
        grid_spec=pltpu.PrefetchScalarGridSpec(
            num_scalar_prefetch=0,
            grid=(B, pl.cdiv(S, tS)),
            in_specs=[
                pl.BlockSpec((None, tS, D), lambda b, s: (b, s, 0)),   # x seq tile (batch squeezed)
                pl.BlockSpec((tS, D), lambda b, s: (s, 0)),            # matching table slice
            ],
            out_specs=pl.BlockSpec((None, tS, 2 * D), lambda b, s: (b, s, 0)),
        ),
        compiler_params=pltpu.CompilerParams(
            dimension_semantics=("parallel", "parallel"), **cparams
        ),
    )(x, table)
    return out


def _reference(x, *, d_hid, n_position):
    B, S, D = x.shape
    pos_table = make_sinusoid_table(n_position, d_hid)
    return jnp.concatenate(
        [x, jnp.broadcast_to(pos_table[:S, :D][None].astype(x.dtype), (B, S, D))], axis=-1
    )


if __name__ == "__main__":
    key = jax.random.PRNGKey(0)

    # 1) Main example (module-consistent small shapes): batch=2, seq=8, hidden=32.
    B, S, D = 2, 8, 32
    n_position, d_hid = 16, 32
    x = jax.random.normal(key, (B, S, D), dtype=jnp.float32)

    out = jax.block_until_ready(positional_encoding_forward(x, d_hid=d_hid, n_position=n_position))
    ref = _reference(x, d_hid=d_hid, n_position=n_position)
    assert out.shape == (B, S, 2 * D)
    assert jnp.allclose(out, ref, atol=1e-6), "Path A (row-folded) mismatch vs reference"

    # 2) Same shapes through the large-S fallback path (forced), to validate it too.
    out_b = jax.block_until_ready(
        positional_encoding_forward(x, d_hid=d_hid, n_position=n_position, seq_tiled=True)
    )
    assert jnp.allclose(out_b, ref, atol=1e-6), "Path B (seq-tiled) mismatch vs reference"

    # 3) Lane-aligned branch (D % 128 == 0): two unmasked sub-stores.
    B2, S2, D2 = 2, 8, 128
    n_position2, d_hid2 = 16, 128
    x2 = jax.random.normal(jax.random.PRNGKey(0), (B2, S2, D2), dtype=jnp.float32)
    out2 = jax.block_until_ready(
        positional_encoding_forward(x2, d_hid=d_hid2, n_position=n_position2)
    )
    ref2 = _reference(x2, d_hid=d_hid2, n_position=n_position2)
    assert out2.shape == (B2, S2, 2 * D2)
    assert jnp.allclose(out2, ref2, atol=1e-6), "aligned-store branch mismatch vs reference"

    print("KERNEL_OK")
</pallas_src>

<mosaic_0001>
module attributes {stable_mosaic.version = 11 : i64} {
  func.func @_pe_concat_kernel(%arg0: i32, %arg1: memref<8x32xf32, #tpu.memory_space<vmem>>, %arg2: memref<8x32xf32, #tpu.memory_space<vmem>>, %arg3: memref<8x64xf32, #tpu.memory_space<vmem>>) attributes {dimension_semantics = [#tpu.dimension_semantics<parallel>], iteration_bounds = array<i64: 2>, scalar_prefetch = 0 : i64, scratch_operands = 0 : i64, tpu.core_type = #tpu.core_type<tc>, window_params = [{transform_indices = @transform_0, window_bounds = array<i64: 8, 32>}, {pipeline_mode = #tpu.pipeline_mode<synchronous>, transform_indices = @transform_1, window_bounds = array<i64: 8, 32>}, {transform_indices = @transform_2, window_bounds = array<i64: 8, 64>}]} {
    %c0 = arith.constant 0 : index
    %c0_0 = arith.constant 0 : index
    %0 = vector.load %arg1[%c0, %c0_0] : memref<8x32xf32, #tpu.memory_space<vmem>>, vector<8x32xf32>
    %c0_1 = arith.constant 0 : index
    %c0_2 = arith.constant 0 : index
    %1 = vector.load %arg2[%c0_1, %c0_2] : memref<8x32xf32, #tpu.memory_space<vmem>>, vector<8x32xf32>
    %2 = tpu.concatenate %0, %1 in 1 : vector<8x32xf32>, vector<8x32xf32> -> vector<8x64xf32>
    %c0_3 = arith.constant 0 : index
    %c0_4 = arith.constant 0 : index
    %3 = vector.load %arg3[%c0_3, %c0_4] : memref<8x64xf32, #tpu.memory_space<vmem>>, vector<8x64xf32>
    tpu.vector_store %arg3[%c0_3, %c0_4], %2 {strides = array<i32>} : memref<8x64xf32, #tpu.memory_space<vmem>>, vector<8x64xf32>,
    return
  }
  func.func @transform_0(%arg0: i32) -> (i32, i32) {
    %c0_i32 = arith.constant 0 : i32
    %c0_i32_0 = arith.constant 0 : i32
    return %arg0, %c0_i32 : i32, i32
  }
  func.func @transform_1(%arg0: i32) -> (i32, i32) {
    %c0_i32 = arith.constant 0 : i32
    %c0_i32_0 = arith.constant 0 : i32
    %c0_i32_1 = arith.constant 0 : i32
    return %c0_i32, %c0_i32_0 : i32, i32
  }
  func.func @transform_2(%arg0: i32) -> (i32, i32) {
    %c0_i32 = arith.constant 0 : i32
    %c0_i32_0 = arith.constant 0 : i32
    return %arg0, %c0_i32 : i32, i32
  }
}

</mosaic_0001>

<llo_original>
// kernel: tpu_custom_call.1
$region0: #{tpu_custom_call.1}
  #allocation0 [shape = 'u32[]', space=smem, size = 0x4, offset = 0x4, fixed_abs, tag = 'smem constant byte address 0x4 - core index']
  #allocation1 [shape = 'u32[144,128]{1,0:T(1,128)}', space=vmem, size = 0x12000, scoped, tag = 'internal scratch']
  %s0 = inlined_call_operand.hbm [shape: f32[16,32], index: 0, kind: input, shape index: {}]
  %s1 = inlined_call_operand.hbm [shape: f32[8,32], index: 1, kind: input, shape index: {}]
  %s2 = inlined_call_operand.hbm [shape: f32[16,64], index: 2, kind: output, shape index: {}]
  %s3 = sld [smem:[#allocation0]]
  $region49: #{tpu_custom_call.1} parent=0
    _
  %s5 = ssub.s32 1, %s3
  %s6 = scalar_select 0, %s5, %s3
  $region1: #{tpu_custom_call.1} parent=0
    #allocation2 [shape = 'u8[8192]{0}', space=vmem, size = 0x2000, scoped, tag = 'input window, operand 0']
    #allocation3 [shape = 's32[2]{0}', space=sflag, size = 0x8, scoped, tag = 'scoped memory for tpu_custom_call.1']
    #allocation4 [shape = 's32[2]{0}', space=sflag, size = 0x8, scoped, tag = 'scoped memory for tpu_custom_call.1']
    #allocation5 [shape = 'u8[4096]{0}', space=vmem, size = 0x1000, scoped, tag = 'input window, operand 1, single buffered']
    #allocation6 [shape = 's32[1]{0}', space=sflag, size = 0x4, scoped, tag = 'scoped memory for tpu_custom_call.1']
    #allocation7 [shape = 'u8[8192]{0}', space=vmem, size = 0x2000, scoped, tag = 'output window, operand 0']
    %7 = vsyncpa [#allocation3], 0
    %s8 = scalar_lea.sflag [#allocation3], 1
    %9 = vsyncpa %s8, 0
    %10 = vsyncpa [#allocation6], 0
    %11 = vsyncpa [#allocation4], 0
    %s12 = scalar_lea.sflag [#allocation4], 1
    %13 = vsyncpa %s12, 0
    loop: start=0, step=1, limit=4
    $region2: #{tpu_custom_call.1} parent=1 // loop_pre_header
      _
    $region3: #{tpu_custom_call.1} parent=1 // loop_header
      %s15 = sphi 0, %s19
      %p16 = scmp.ge.s32.totalorder %s15, 4
      %s25 = sphi 0, %s27
      %s28 = sphi 0, %s25
      %s29 = sphi 0, %s28
      %s45 = sphi 0, %s29
      %s49 = sphi 0, %s49
      %s51 = sphi 0, %s49
      %s52 = sphi 0, %s51
      %s66 = sphi 0, %s52
      %s72 = sphi 0, %s74
      %s75 = sphi 0, %s72
      %s76 = sphi 0, %s75
      %s92 = sphi 0, %s76
    $region4: #{tpu_custom_call.1} parent=1 // loop_header_branch
      %18 = sbr.rel (%p16) target = $region8
    $region5: #{tpu_custom_call.1} parent=1 // loop_body
      %s20 = ssub.s32 %s15, 1
      %s21 = ssub.s32 %s15, 2
      %s22 = sadd.s32 %s15, 1
      %s23 = ssub.s32 %s15, %s22
      %p24 = scmp.eq.s32.totalorder %s23, 0
      %s26 = sadd.s32 %s25, 1
      %s27 = scalar_select %p24, %s25, %s26
      %p30 = pneg %p24
      %p31 = scmp.eq.s32.totalorder %s15, 1
      %p32 = por %p30, %p31
      %p33 = scmp.ne.s32.totalorder %s25, %s28
      %p34 = scmp.eq.s32.totalorder %s15, 0
      %p35 = por %p33, %p34
      %p36 = scmp.ne.s32.totalorder %s25, %s28
      %p37 = scmp.eq.s32.totalorder %s20, 1
      %p38 = por %p36, %p37
      %p39 = scmp.ne.s32.totalorder %s28, %s29
      %p40 = scmp.eq.s32.totalorder %s20, 0
      %p41 = por %p39, %p40
      %p42 = scmp.ne.s32.totalorder %s28, %s29
      %p43 = scmp.eq.s32.totalorder %s21, 1
      %p44 = por %p42, %p43
      %p46 = scmp.ne.s32.totalorder %s29, %s45
      %p47 = scmp.eq.s32.totalorder %s21, 0
      %p48 = por %p46, %p47
      %s50 = sadd.s32 %s49, 1
      %p53 = scmp.eq.s32.totalorder %s15, 1
      %p54 = scmp.ne.s32.totalorder %s49, %s51
      %p55 = scmp.eq.s32.totalorder %s15, 0
      %p56 = por %p54, %p55
      %p57 = scmp.ne.s32.totalorder %s49, %s51
      %p58 = scmp.eq.s32.totalorder %s20, 1
      %p59 = por %p57, %p58
      %p60 = scmp.ne.s32.totalorder %s51, %s52
      %p61 = scmp.eq.s32.totalorder %s20, 0
      %p62 = por %p60, %p61
      %p63 = scmp.ne.s32.totalorder %s51, %s52
      %p64 = scmp.eq.s32.totalorder %s21, 1
      %p65 = por %p63, %p64
      %p67 = scmp.ne.s32.totalorder %s52, %s66
      %p68 = scmp.eq.s32.totalorder %s21, 0
      %p69 = por %p67, %p68
      %s70 = ssub.s32 %s15, %s22
      %p71 = scmp.eq.s32.totalorder %s70, 0
      %s73 = sadd.s32 %s72, 1
      %s74 = scalar_select %p71, %s72, %s73
      %p77 = pneg %p71
      %p78 = scmp.eq.s32.totalorder %s15, 1
      %p79 = por %p77, %p78
      %p80 = scmp.ne.s32.totalorder %s72, %s75
      %p81 = scmp.eq.s32.totalorder %s15, 0
      %p82 = por %p80, %p81
      %p83 = scmp.ne.s32.totalorder %s72, %s75
      %p84 = scmp.eq.s32.totalorder %s20, 1
      %p85 = por %p83, %p84
      %p86 = scmp.ne.s32.totalorder %s75, %s76
      %p87 = scmp.eq.s32.totalorder %s20, 0
      %p88 = por %p86, %p87
      %p89 = scmp.ne.s32.totalorder %s75, %s76
      %p90 = scmp.eq.s32.totalorder %s21, 1
      %p91 = por %p89, %p90
      %p93 = scmp.ne.s32.totalorder %s76, %s92
      %p94 = scmp.eq.s32.totalorder %s21, 0
      %p95 = por %p93, %p94
      %p96 = scmp.le.s32.totalorder 1, %s15
      %p97 = scmp.lt.s32.totalorder %s15, 3
      %p98 = pnand %p96, %p97
      %p99 = pneg %p98
      // Predicated region
      $region9: #{tpu_custom_call.1} parent=5 // pred_check
        _
      $region10: #{tpu_custom_call.1} parent=5 // pred_check_branch
        %101 = sbr.rel (%p98) target = $region12
      $region11: #{tpu_custom_call.1} parent=5 // pred_region
        %s102 = ssub.s32 %s15, 1
        // Predicated region
        $region13: #{tpu_custom_call.1} parent=11 // pred_check
          %p103 = pneg %p62
        $region14: #{tpu_custom_call.1} parent=11 // pred_check_branch
          %105 = sbr.rel (%p103) target = $region16
        $region15: #{tpu_custom_call.1} parent=11 // pred_region
          %s107 = ssub.s32 128, 128
          %108 = vsyncadd [#allocation6], %s107
          %s110 = sshll.u32 [#allocation5], 4
          %s111 = int_to_ptr.vmem [resolvable:$true] %s110
          %113 = dma.hbm_to_vmem [thread:$0]  %s1, 128, %s111, [#allocation6]
        $region16: #{tpu_custom_call.1} parent=11 // pred_fallthru
          _
      $region12: #{tpu_custom_call.1} parent=5 // pred_fallthru
        _
      %p114 = scmp.lt.s32.totalorder %s15, 2
      // Predicated region
      $region17: #{tpu_custom_call.1} parent=5 // pred_check
        %p115 = pneg %p114
      $region18: #{tpu_custom_call.1} parent=5 // pred_check_branch
        %117 = sbr.rel (%p115) target = $region20
      $region19: #{tpu_custom_call.1} parent=5 // pred_region
        // Predicated region
        $region21: #{tpu_custom_call.1} parent=19 // pred_check
          %p118 = pneg %p35
        $region22: #{tpu_custom_call.1} parent=19 // pred_check_branch
          %120 = sbr.rel (%p118) target = $region24
        $region23: #{tpu_custom_call.1} parent=19 // pred_region
          %s121 = sand.u32 %s25, 1
          %s122 = scalar_lea.sflag [#allocation3], %s121
          %s123 = sand.u32 %s25, 1
          %s124 = smul.addr %s123, 8
          %s125 = scalar_lea.vmem [#allocation2], %s124
          %s127 = ssub.s32 128, 128
          %128 = vsyncadd %s122, %s127
          %s129 = smul.addr %s15, 128
          %s130 = scalar_lea.hbm %s0, %s129
          %s132 = sshll.u32 %s125, 4
          %s133 = int_to_ptr.vmem [resolvable:$true] %s132
          %135 = dma.hbm_to_vmem [thread:$0]  %s130, 128, %s133, %s122
        $region24: #{tpu_custom_call.1} parent=19 // pred_fallthru
          _
      $region20: #{tpu_custom_call.1} parent=5 // pred_fallthru
        _
      %p136 = scmp.le.s32.totalorder 1, %s15
      %p137 = scmp.lt.s32.totalorder %s15, 3
      %p138 = pnand %p136, %p137
      %p139 = pneg %p138
      // Predicated region
      $region25: #{tpu_custom_call.1} parent=5 // pred_check
        _
      $region26: #{tpu_custom_call.1} parent=5 // pred_check_branch
        %141 = sbr.rel (%p138) target = $region28
      $region27: #{tpu_custom_call.1} parent=5 // pred_region
        %s142 = ssub.s32 %s15, 1
        %s143 = sand.u32 %s28, 1
        %s144 = scalar_lea.sflag [#allocation3], %s143
        %s145 = sand.u32 %s28, 1
        %s146 = smul.addr %s145, 8
        %s147 = scalar_lea.vmem [#allocation2], %s146
        // Predicated region
        $region29: #{tpu_custom_call.1} parent=27 // pred_check
          %p148 = pneg %p41
        $region30: #{tpu_custom_call.1} parent=27 // pred_check_branch
          %150 = sbr.rel (%p148) target = $region32
        $region31: #{tpu_custom_call.1} parent=27 // pred_region
          %151 = dma.done %s144, 128
        $region32: #{tpu_custom_call.1} parent=27 // pred_fallthru
          _
        // Predicated region
        $region33: #{tpu_custom_call.1} parent=27 // pred_check
          %p152 = pneg %p62
        $region34: #{tpu_custom_call.1} parent=27 // pred_check_branch
          %154 = sbr.rel (%p152) target = $region36
        $region35: #{tpu_custom_call.1} parent=27 // pred_region
          %155 = dma.done [#allocation6], 128
        $region36: #{tpu_custom_call.1} parent=27 // pred_fallthru
          _
        %s156 = sand.u32 %s28, 1
        %s157 = scalar_lea.sflag [#allocation3], %s156
        %s158 = sand.u32 %s28, 1
        %s159 = smul.addr %s158, 8
        %s160 = scalar_lea.vmem [#allocation2], %s159
        %p161 = pneg %p41
        %p162 = pneg %p38
        %p163 = pneg %p62
        %p164 = pneg %p59
        %p165 = pneg %p88
        %p166 = pneg %p85
        %s167 = sand.u32 %s75, 1
        %s168 = scalar_lea.sflag [#allocation4], %s167
        %s169 = sand.u32 %s75, 1
        %s170 = smul.addr %s169, 8
        %s171 = scalar_lea.vmem [#allocation7], %s170
        %v172 = vld [vmem:[%s147] sm:$0xff]
        %v173 = vld [vmem:[#allocation5] sm:$0xff]
        %175 = vrot.lane.b32.xlu0 %v173, 32
        %v176 = vpop.permute.xlu0 %175
        %vm178 = vcmask 261120
        %v179 = vsel %vm178, %v172, %v176
        %vm180 = vcmask 523264
        %181 = vst.msk [vmem:[%s171] sm:$0xff] %vm180, %v179
        %s182 = sand.u32 %s75, 1
        %s183 = scalar_lea.sflag [#allocation4], %s182
        %s184 = sand.u32 %s75, 1
        %s185 = smul.addr %s184, 8
        %s186 = scalar_lea.vmem [#allocation7], %s185
        // Predicated region
        $region37: #{tpu_custom_call.1} parent=27 // pred_check
          %p187 = pneg %p85
        $region38: #{tpu_custom_call.1} parent=27 // pred_check_branch
          %189 = sbr.rel (%p187) target = $region40
        $region39: #{tpu_custom_call.1} parent=27 // pred_region
          %s191 = ssub.s32 128, 128
          %192 = vsyncadd %s183, %s191
          %s193 = smul.addr %s20, 128
          %s194 = scalar_lea.hbm %s2, %s193
          %s196 = sshll.u32 %s186, 4
          %s197 = int_to_ptr.vmem [resolvable:$true] %s196
          %199 = dma.vmem_to_hbm [thread:$0]  %s197, 128, %s194, %s183
        $region40: #{tpu_custom_call.1} parent=27 // pred_fallthru
          _
      $region28: #{tpu_custom_call.1} parent=5 // pred_fallthru
        _
      %p200 = scmp.le.s32.totalorder 2, %s15
      // Predicated region
      $region41: #{tpu_custom_call.1} parent=5 // pred_check
        %p201 = pneg %p200
      $region42: #{tpu_custom_call.1} parent=5 // pred_check_branch
        %203 = sbr.rel (%p201) target = $region44
      $region43: #{tpu_custom_call.1} parent=5 // pred_region
        %s204 = ssub.s32 %s15, 2
        // Predicated region
        $region45: #{tpu_custom_call.1} parent=43 // pred_check
          %p205 = pneg %p91
        $region46: #{tpu_custom_call.1} parent=43 // pred_check_branch
          %207 = sbr.rel (%p205) target = $region48
        $region47: #{tpu_custom_call.1} parent=43 // pred_region
          %s208 = sand.u32 %s76, 1
          %s209 = scalar_lea.sflag [#allocation4], %s208
          %s210 = sand.u32 %s76, 1
          %s211 = smul.addr %s210, 8
          %s212 = scalar_lea.vmem [#allocation7], %s211
          %213 = dma.done %s209, 128
        $region48: #{tpu_custom_call.1} parent=43 // pred_fallthru
          _
      $region44: #{tpu_custom_call.1} parent=5 // pred_fallthru
        _
    $region6: #{tpu_custom_call.1} parent=1 // loop_footer
      %s19 = sadd.s32 1, %s15
    $region7: #{tpu_custom_call.1} parent=1 // loop_footer_branch
      %14 = sbr.rel target = $region3
    $region8: #{tpu_custom_call.1} parent=1 // loop_exit
      _
    %214 = vsyncpa [#allocation3], 1
    %s215 = scalar_lea.sflag [#allocation3], 1
    %216 = vsyncpa %s215, 1
    %217 = vsyncpa [#allocation6], 1
    %218 = vsyncpa [#allocation4], 1
    %s219 = scalar_lea.sflag [#allocation4], 1
    %220 = vsyncpa %s219, 1

</llo_original>
